<compile_context>
chip_gen: v6e
topology: v6e:2x2x1
jax: 0.10.0
libtpu: 0.0.40
codegen_flags: <defaults>
</compile_context>

<pallas_src>
import jax
import jax.numpy as jnp
from jax.experimental import pallas as pl
from jax.experimental.pallas import tpu as pltpu

IN_F = 100
HID = 20
OUT_F = 3          # data == 'sci' -> n = 3
PACK_W = 128       # lane-dense packed output width (lanes 0:20 lin_out, 20:23 out)
TB_CAP = 2048      # batch-tile cap (past the ~1024-row HBM-roofline knee, VMEM-safe)


def _round_up(a, m):
    return ((a + m - 1) // m) * m


def ff_kernel(x_ref, w1_ref, b1_ref, w2_ref, b2_ref, packed_ref):
    x = x_ref[...]                                             # (TB, 100)
    # lin_out = x @ W1 + b1  -> (TB, 20)
    lin_out = jnp.dot(x, w1_ref[...],
                      preferred_element_type=jnp.float32) + b1_ref[...]
    h = jnp.maximum(lin_out, 0.0)                              # ReLU
    # out = h @ W2 + b2      -> (TB, 3)
    out = jnp.dot(h, w2_ref[...],
                  preferred_element_type=jnp.float32) + b2_ref[...]
    # Single lane-dense store: [lin_out | out | zeros] -> (TB, 128)
    tb = x.shape[0]
    pad = jnp.zeros((tb, PACK_W - HID - OUT_F), jnp.float32)
    packed_ref[...] = jnp.concatenate([lin_out, out, pad], axis=-1)


def feedforward1_forward(x, w1, b1, w2, b2):
    """x: (B, 100) f32. w1: (20,100), b1: (20,), w2: (3,20), b2: (3,) (PyTorch layout)."""
    B = x.shape[0]
    x = jnp.asarray(x, jnp.float32)

    # Pre-transpose weights to (in, out); biases -> (1, out) for broadcast.
    w1_t = jnp.asarray(w1, jnp.float32).T                      # (100, 20)
    w2_t = jnp.asarray(w2, jnp.float32).T                      # (20, 3)
    b1_r = jnp.asarray(b1, jnp.float32).reshape(1, HID)
    b2_r = jnp.asarray(b2, jnp.float32).reshape(1, OUT_F)

    # Batch tiling: TB multiple of 8 (sublane), capped for VMEM; pad B if needed.
    b8 = _round_up(B, 8)
    TB = min(TB_CAP, b8)
    B_pad = _round_up(b8, TB)
    if B_pad != B:
        x = jnp.pad(x, ((0, B_pad - B), (0, 0)))

    grid = (pl.cdiv(B_pad, TB),)

    packed = pl.pallas_call(
        ff_kernel,
        out_shape=jax.ShapeDtypeStruct((B_pad, PACK_W), jnp.float32),
        grid_spec=pltpu.PrefetchScalarGridSpec(
            num_scalar_prefetch=0,
            grid=grid,
            in_specs=[
                pl.BlockSpec((TB, IN_F), lambda i: (i, 0)),     # x: tiled over batch
                pl.BlockSpec((IN_F, HID), lambda i: (0, 0)),    # weights resident
                pl.BlockSpec((1, HID), lambda i: (0, 0)),
                pl.BlockSpec((HID, OUT_F), lambda i: (0, 0)),
                pl.BlockSpec((1, OUT_F), lambda i: (0, 0)),
            ],
            out_specs=pl.BlockSpec((TB, PACK_W), lambda i: (i, 0)),
        ),
        compiler_params=pltpu.CompilerParams(
            dimension_semantics=("parallel",)),
    )(x, w1_t, b1_r, w2_t, b2_r)

    lin_out = packed[:B, :HID]
    out = packed[:B, HID:HID + OUT_F]
    return out, lin_out


def init_params(key):
    k1, k2, k3, k4 = jax.random.split(key, 4)
    # Deterministic init mimicking nn.Linear's uniform(-1/sqrt(fan_in), 1/sqrt(fan_in))
    lim1 = 1.0 / jnp.sqrt(IN_F)
    lim2 = 1.0 / jnp.sqrt(HID)
    w1 = jax.random.uniform(k1, (HID, IN_F), jnp.float32, -lim1, lim1)
    b1 = jax.random.uniform(k2, (HID,), jnp.float32, -lim1, lim1)
    w2 = jax.random.uniform(k3, (OUT_F, HID), jnp.float32, -lim2, lim2)
    b2 = jax.random.uniform(k4, (OUT_F,), jnp.float32, -lim2, lim2)
    return w1, b1, w2, b2


if __name__ == "__main__":
    key = jax.random.PRNGKey(0)
    kx, kp = jax.random.split(key)
    B = 8
    x = jax.random.normal(kx, (B, IN_F), jnp.float32)
    w1, b1, w2, b2 = init_params(kp)

    out, lin_out = feedforward1_forward(x, w1, b1, w2, b2)
    jax.block_until_ready((out, lin_out))

    # Pure-JAX reference check (dropout is identity in eval mode)
    lin_ref = x @ w1.T + b1
    out_ref = jnp.maximum(lin_ref, 0.0) @ w2.T + b2
    assert out.shape == (B, OUT_F) and lin_out.shape == (B, HID)
    assert jnp.allclose(out, out_ref, atol=1e-4, rtol=1e-4)
    assert jnp.allclose(lin_out, lin_ref, atol=1e-4, rtol=1e-4)

    print("KERNEL_OK")
</pallas_src>

<mosaic_0001>
module attributes {stable_mosaic.version = 11 : i64} {
  func.func @ff_kernel(%arg0: i32, %arg1: memref<8x100xf32, #tpu.memory_space<vmem>>, %arg2: memref<100x20xf32, #tpu.memory_space<vmem>>, %arg3: memref<1x20xf32, #tpu.memory_space<vmem>>, %arg4: memref<20x3xf32, #tpu.memory_space<vmem>>, %arg5: memref<1x3xf32, #tpu.memory_space<vmem>>, %arg6: memref<8x128xf32, #tpu.memory_space<vmem>>) attributes {dimension_semantics = [#tpu.dimension_semantics<parallel>], iteration_bounds = array<i64: 1>, scalar_prefetch = 0 : i64, scratch_operands = 0 : i64, tpu.core_type = #tpu.core_type<tc>, window_params = [{transform_indices = @transform_0, window_bounds = array<i64: 8, 100>}, {pipeline_mode = #tpu.pipeline_mode<synchronous>, transform_indices = @transform_1, window_bounds = array<i64: 100, 20>}, {pipeline_mode = #tpu.pipeline_mode<synchronous>, transform_indices = @transform_2, window_bounds = array<i64: 1, 20>}, {pipeline_mode = #tpu.pipeline_mode<synchronous>, transform_indices = @transform_3, window_bounds = array<i64: 20, 3>}, {pipeline_mode = #tpu.pipeline_mode<synchronous>, transform_indices = @transform_4, window_bounds = array<i64: 1, 3>}, {transform_indices = @transform_5, window_bounds = array<i64: 8, 128>}]} {
    %c0 = arith.constant 0 : index
    %c0_0 = arith.constant 0 : index
    %0 = vector.load %arg1[%c0, %c0_0] : memref<8x100xf32, #tpu.memory_space<vmem>>, vector<8x100xf32>
    %c0_1 = arith.constant 0 : index
    %c0_2 = arith.constant 0 : index
    %1 = vector.load %arg2[%c0_1, %c0_2] : memref<100x20xf32, #tpu.memory_space<vmem>>, vector<100x20xf32>
    %cst = arith.constant dense<0.000000e+00> : vector<8x20xf32>
    %2 = tpu.matmul %0, %1, %cst {dimension_numbers = #tpu.dot_dimension_numbers<[1], [0], [0], [1], [0, 0, 1, 1], [], []>} : vector<8x100xf32>, vector<100x20xf32>, vector<8x20xf32> -> vector<8x20xf32>
    %c0_3 = arith.constant 0 : index
    %c0_4 = arith.constant 0 : index
    %3 = vector.load %arg3[%c0_3, %c0_4] : memref<1x20xf32, #tpu.memory_space<vmem>>, vector<1x20xf32>
    %4 = vector.broadcast %3 : vector<1x20xf32> to vector<8x20xf32>
    %5 = arith.addf %2, %4 : vector<8x20xf32>
    %cst_5 = arith.constant 0.000000e+00 : f32
    %6 = vector.broadcast %cst_5 : f32 to vector<8x20xf32>
    %7 = arith.maximumf %5, %6 : vector<8x20xf32>
    %c0_6 = arith.constant 0 : index
    %c0_7 = arith.constant 0 : index
    %8 = vector.load %arg4[%c0_6, %c0_7] : memref<20x3xf32, #tpu.memory_space<vmem>>, vector<20x3xf32>
    %cst_8 = arith.constant dense<0.000000e+00> : vector<8x3xf32>
    %9 = tpu.matmul %7, %8, %cst_8 {dimension_numbers = #tpu.dot_dimension_numbers<[1], [0], [0], [1], [0, 0, 1, 1], [], []>} : vector<8x20xf32>, vector<20x3xf32>, vector<8x3xf32> -> vector<8x3xf32>
    %c0_9 = arith.constant 0 : index
    %c0_10 = arith.constant 0 : index
    %10 = vector.load %arg5[%c0_9, %c0_10] : memref<1x3xf32, #tpu.memory_space<vmem>>, vector<1x3xf32>
    %11 = vector.broadcast %10 : vector<1x3xf32> to vector<8x3xf32>
    %12 = arith.addf %9, %11 : vector<8x3xf32>
    %cst_11 = arith.constant 0.000000e+00 : f32
    %13 = vector.broadcast %cst_11 : f32 to vector<8x105xf32>
    %14 = tpu.concatenate %5, %12, %13 in 1 : vector<8x20xf32>, vector<8x3xf32>, vector<8x105xf32> -> vector<8x128xf32>
    %c0_12 = arith.constant 0 : index
    %c0_13 = arith.constant 0 : index
    %15 = vector.load %arg6[%c0_12, %c0_13] : memref<8x128xf32, #tpu.memory_space<vmem>>, vector<8x128xf32>
    tpu.vector_store %arg6[%c0_12, %c0_13], %14 {strides = array<i32>} : memref<8x128xf32, #tpu.memory_space<vmem>>, vector<8x128xf32>,
    return
  }
  func.func @transform_0(%arg0: i32) -> (i32, i32) {
    %c0_i32 = arith.constant 0 : i32
    %c0_i32_0 = arith.constant 0 : i32
    return %arg0, %c0_i32 : i32, i32
  }
  func.func @transform_1(%arg0: i32) -> (i32, i32) {
    %c0_i32 = arith.constant 0 : i32
    %c0_i32_0 = arith.constant 0 : i32
    %c0_i32_1 = arith.constant 0 : i32
    return %c0_i32, %c0_i32_0 : i32, i32
  }
  func.func @transform_2(%arg0: i32) -> (i32, i32) {
    %c0_i32 = arith.constant 0 : i32
    %c0_i32_0 = arith.constant 0 : i32
    %c0_i32_1 = arith.constant 0 : i32
    return %c0_i32, %c0_i32_0 : i32, i32
  }
  func.func @transform_3(%arg0: i32) -> (i32, i32) {
    %c0_i32 = arith.constant 0 : i32
    %c0_i32_0 = arith.constant 0 : i32
    %c0_i32_1 = arith.constant 0 : i32
    return %c0_i32, %c0_i32_0 : i32, i32
  }
  func.func @transform_4(%arg0: i32) -> (i32, i32) {
    %c0_i32 = arith.constant 0 : i32
    %c0_i32_0 = arith.constant 0 : i32
    %c0_i32_1 = arith.constant 0 : i32
    return %c0_i32, %c0_i32_0 : i32, i32
  }
  func.func @transform_5(%arg0: i32) -> (i32, i32) {
    %c0_i32 = arith.constant 0 : i32
    %c0_i32_0 = arith.constant 0 : i32
    return %arg0, %c0_i32 : i32, i32
  }
}

</mosaic_0001>

<llo_original>
// kernel: tpu_custom_call.1
$region0: #{tpu_custom_call.1}
  #allocation0 [shape = 'u32[]', space=smem, size = 0x4, offset = 0x4, fixed_abs, tag = 'smem constant byte address 0x4 - core index']
  #allocation1 [shape = 'u32[144,128]{1,0:T(1,128)}', space=vmem, size = 0x12000, scoped, tag = 'internal scratch']
  %s0 = inlined_call_operand.vmem [shape: f32[8,100], index: 0, kind: input, shape index: {}]
  %s1 = inlined_call_operand.vmem [shape: f32[100,20], index: 1, kind: input, shape index: {}]
  %s2 = inlined_call_operand.vmem [shape: f32[1,20], index: 2, kind: input, shape index: {}]
  %s3 = inlined_call_operand.vmem [shape: f32[20,3], index: 3, kind: input, shape index: {}]
  %s4 = inlined_call_operand.vmem [shape: f32[1,3], index: 4, kind: input, shape index: {}]
  %s5 = inlined_call_operand.hbm [shape: f32[8,128], index: 5, kind: output, shape index: {}]
  %s6 = sld [smem:[#allocation0]]
  $region30: #{tpu_custom_call.1} parent=0
    _
  %s8 = ssub.s32 1, %s6
  %s9 = scalar_select 0, %s8, %s6
  $region1: #{tpu_custom_call.1} parent=0
    #allocation2 [shape = 'u8[4096]{0}', space=vmem, size = 0x1000, scoped, tag = 'output window, operand 0, single buffered']
    #allocation3 [shape = 's32[1]{0}', space=sflag, size = 0x4, scoped, tag = 'scoped memory for tpu_custom_call.1']
    %10 = vsyncpa [#allocation3], 0
    // Predicated region
    $region2: #{tpu_custom_call.1} parent=1 // pred_check
      _
    $region3: #{tpu_custom_call.1} parent=1 // pred_check_branch
      %12 = sbr.rel (0) target = $region5
    $region4: #{tpu_custom_call.1} parent=1 // pred_region
      _
    $region5: #{tpu_custom_call.1} parent=1 // pred_fallthru
      _
    // Predicated region
    $region6: #{tpu_custom_call.1} parent=1 // pred_check
      _
    $region7: #{tpu_custom_call.1} parent=1 // pred_check_branch
      %14 = sbr.rel (0) target = $region9
    $region8: #{tpu_custom_call.1} parent=1 // pred_region
      _
    $region9: #{tpu_custom_call.1} parent=1 // pred_fallthru
      _
    // Predicated region
    $region10: #{tpu_custom_call.1} parent=1 // pred_check
      _
    $region11: #{tpu_custom_call.1} parent=1 // pred_check_branch
      %16 = sbr.rel (0) target = $region13
    $region12: #{tpu_custom_call.1} parent=1 // pred_region
      _
    $region13: #{tpu_custom_call.1} parent=1 // pred_fallthru
      _
    // Predicated region
    $region14: #{tpu_custom_call.1} parent=1 // pred_check
      _
    $region15: #{tpu_custom_call.1} parent=1 // pred_check_branch
      %18 = sbr.rel (0) target = $region17
    $region16: #{tpu_custom_call.1} parent=1 // pred_region
      _
    $region17: #{tpu_custom_call.1} parent=1 // pred_fallthru
      _
    // Predicated region
    $region18: #{tpu_custom_call.1} parent=1 // pred_check
      _
    $region19: #{tpu_custom_call.1} parent=1 // pred_check_branch
      %20 = sbr.rel (0) target = $region21
    $region20: #{tpu_custom_call.1} parent=1 // pred_region
      _
    $region21: #{tpu_custom_call.1} parent=1 // pred_fallthru
      _
    %v21 = vld [vmem:[%s0] sm:$0xff]
    %v22 = vld [vmem:[%s1] sm:$0xff]
    %v23 = vld [vmem:[%s1 + $0x8] sm:$0xff]
    %v24 = vld [vmem:[%s1 + $0x10] sm:$0xff]
    %v25 = vld [vmem:[%s1 + $0x18] sm:$0xff]
    %v26 = vld [vmem:[%s1 + $0x20] sm:$0xff]
    %v27 = vld [vmem:[%s1 + $0x28] sm:$0xff]
    %v28 = vld [vmem:[%s1 + $0x30] sm:$0xff]
    %v29 = vld [vmem:[%s1 + $0x38] sm:$0xff]
    %v30 = vld [vmem:[%s1 + $0x40] sm:$0xff]
    %v31 = vld [vmem:[%s1 + $0x48] sm:$0xff]
    %v32 = vld [vmem:[%s1 + $0x50] sm:$0xff]
    %v33 = vld [vmem:[%s1 + $0x58] sm:$0xff]
    %v34 = vld [vmem:[%s1 + $0x60] sm:$0xf]
    %v35 = vld [vmem:[%s2] sm:$0x1]
    %v37 = vlaneseq
    %v38 = vshrl.u32 %v37, 7
    %v39 = vsub.s32 0, %v38
    %v40 = vrot.slane %v35, %v39
    %vm42 = vcmask 818176
    %v44 = vsel %vm42, %v21, 0
    %vm46 = vcmask 1043456
    %v48 = vsel %vm46, %v34, 0
    %50 = vmatprep.subr.mxu0 0.0
    %51 = vmatpush1.msra.mxu0 0.0
    %52 = vmatprep.subr.mxu0 0.0
    %53 = vmatpush1.msra.mxu0 0.0
    %54 = vmatprep.subr.mxu0 0.0
    %55 = vmatpush1.msra.mxu0 0.0
    %56 = vmatprep.subr.mxu0 0.0
    %57 = vmatpush1.msra.mxu0 %v48
    %58 = vmatprep.subr.mxu0 0.0
    %59 = vmatpush1.msra.mxu0 %v33
    %60 = vmatprep.subr.mxu0 0.0
    %61 = vmatpush1.msra.mxu0 %v32
    %62 = vmatprep.subr.mxu0 0.0
    %63 = vmatpush1.msra.mxu0 %v31
    %64 = vmatprep.subr.mxu0 0.0
    %65 = vmatpush1.msra.mxu0 %v30
    %66 = vmatprep.subr.mxu0 0.0
    %67 = vmatpush1.msra.mxu0 %v29
    %68 = vmatprep.subr.mxu0 0.0
    %69 = vmatpush1.msra.mxu0 %v28
    %70 = vmatprep.subr.mxu0 0.0
    %71 = vmatpush1.msra.mxu0 %v27
    %72 = vmatprep.subr.mxu0 0.0
    %73 = vmatpush1.msra.mxu0 %v26
    %74 = vmatprep.subr.mxu0 0.0
    %75 = vmatpush1.msra.mxu0 %v25
    %76 = vmatprep.subr.mxu0 0.0
    %77 = vmatpush1.msra.mxu0 %v24
    %78 = vmatprep.subr.mxu0 0.0
    %79 = vmatpush1.msra.mxu0 %v23
    %80 = vmatprep.subr.mxu0 0.0
    %81 = vmatpush1.msra.mxu0 %v22
    %82 = vmatprep.subr.mxu0 0.0
    %83 = vmatpush2.msra.mxu0 0.0
    %84 = vmatprep.subr.mxu0 0.0
    %85 = vmatpush2.msra.mxu0 0.0
    %86 = vmatprep.subr.mxu0 0.0
    %87 = vmatpush2.msra.mxu0 0.0
    %88 = vmatprep.subr.mxu0 0.0
    %89 = vmatpush2.msra.mxu0 0.0
    %90 = vmatprep.subr.mxu0 0.0
    %91 = vmatpush2.msra.mxu0 0.0
    %92 = vmatprep.subr.mxu0 0.0
    %93 = vmatpush2.msra.mxu0 0.0
    %94 = vmatprep.subr.mxu0 0.0
    %95 = vmatpush2.msra.mxu0 0.0
    %96 = vmatprep.subr.mxu0 0.0
    %97 = vmatpush2.msra.mxu0 0.0
    %98 = vmatprep.subr.mxu0 0.0
    %99 = vmatpush2.msra.mxu0 0.0
    %100 = vmatprep.subr.mxu0 0.0
    %101 = vmatpush2.msra.mxu0 0.0
    %102 = vmatprep.subr.mxu0 0.0
    %103 = vmatpush2.msra.mxu0 0.0
    %104 = vmatprep.subr.mxu0 0.0
    %105 = vmatpush2.msra.mxu0 0.0
    %106 = vmatprep.subr.mxu0 0.0
    %107 = vmatpush2.msra.mxu0 0.0
    %108 = vmatprep.subr.mxu0 0.0
    %109 = vmatpush2.msra.mxu0 0.0
    %110 = vmatprep.subr.mxu0 0.0
    %111 = vmatpush2.msra.mxu0 0.0
    %112 = vmatprep.subr.mxu0 0.0
    %113 = vmatpush2.msra.mxu0 0.0
    %114 = vmatprep.mubr.f32.mxu0 0.0
    %115 = vmatmul.mubr.f32.gmra.mxu0 %v44
    %v116 = vpop.f32.mrf.mxu0
    %v117 = vadd.f32 %v40, %v116
    %v118 = vpop.f32.mrf.mxu0
    %119 = vdwg.mxu0
    %v120 = vmax.f32 %v117, 0.0
    %v121 = vld [vmem:[%s3] sm:$0xff]
    %v122 = vld [vmem:[%s3 + $0x8] sm:$0xff]
    %v123 = vld [vmem:[%s3 + $0x10] sm:$0xf]
    %v124 = vld [vmem:[%s4] sm:$0x1]
    %v126 = vlaneseq
    %v127 = vshrl.u32 %v126, 7
    %v128 = vsub.s32 0, %v127
    %v129 = vrot.slane %v124, %v128
    %vm131 = vcmask 162816
    %v133 = vsel %vm131, %v120, 0
    %v136 = vsel %vm46, %v123, 0
    %138 = vmatprep.subr.mxu0 0.0
    %139 = vmatpush1.msra.mxu0 0.0
    %140 = vmatprep.subr.mxu0 0.0
    %141 = vmatpush1.msra.mxu0 0.0
    %142 = vmatprep.subr.mxu0 0.0
    %143 = vmatpush1.msra.mxu0 0.0
    %144 = vmatprep.subr.mxu0 0.0
    %145 = vmatpush1.msra.mxu0 0.0
    %146 = vmatprep.subr.mxu0 0.0
    %147 = vmatpush1.msra.mxu0 0.0
    %148 = vmatprep.subr.mxu0 0.0
    %149 = vmatpush1.msra.mxu0 0.0
    %150 = vmatprep.subr.mxu0 0.0
    %151 = vmatpush1.msra.mxu0 0.0
    %152 = vmatprep.subr.mxu0 0.0
    %153 = vmatpush1.msra.mxu0 0.0
    %154 = vmatprep.subr.mxu0 0.0
    %155 = vmatpush1.msra.mxu0 0.0
    %156 = vmatprep.subr.mxu0 0.0
    %157 = vmatpush1.msra.mxu0 0.0
    %158 = vmatprep.subr.mxu0 0.0
    %159 = vmatpush1.msra.mxu0 0.0
    %160 = vmatprep.subr.mxu0 0.0
    %161 = vmatpush1.msra.mxu0 0.0
    %162 = vmatprep.subr.mxu0 0.0
    %163 = vmatpush1.msra.mxu0 0.0
    %164 = vmatprep.subr.mxu0 0.0
    %165 = vmatpush1.msra.mxu0 %v136
    %166 = vmatprep.subr.mxu0 0.0
    %167 = vmatpush1.msra.mxu0 %v122
    %168 = vmatprep.subr.mxu0 0.0
    %169 = vmatpush1.msra.mxu0 %v121
    %170 = vmatprep.subr.mxu0 0.0
    %171 = vmatpush2.msra.mxu0 0.0
    %172 = vmatprep.subr.mxu0 0.0
    %173 = vmatpush2.msra.mxu0 0.0
    %174 = vmatprep.subr.mxu0 0.0
    %175 = vmatpush2.msra.mxu0 0.0
    %176 = vmatprep.subr.mxu0 0.0
    %177 = vmatpush2.msra.mxu0 0.0
    %178 = vmatprep.subr.mxu0 0.0
    %179 = vmatpush2.msra.mxu0 0.0
    %180 = vmatprep.subr.mxu0 0.0
    %181 = vmatpush2.msra.mxu0 0.0
    %182 = vmatprep.subr.mxu0 0.0
    %183 = vmatpush2.msra.mxu0 0.0
    %184 = vmatprep.subr.mxu0 0.0
    %185 = vmatpush2.msra.mxu0 0.0
    %186 = vmatprep.subr.mxu0 0.0
    %187 = vmatpush2.msra.mxu0 0.0
    %188 = vmatprep.subr.mxu0 0.0
    %189 = vmatpush2.msra.mxu0 0.0
    %190 = vmatprep.subr.mxu0 0.0
    %191 = vmatpush2.msra.mxu0 0.0
    %192 = vmatprep.subr.mxu0 0.0
    %193 = vmatpush2.msra.mxu0 0.0
    %194 = vmatprep.subr.mxu0 0.0
    %195 = vmatpush2.msra.mxu0 0.0
    %196 = vmatprep.subr.mxu0 0.0
    %197 = vmatpush2.msra.mxu0 0.0
    %198 = vmatprep.subr.mxu0 0.0
    %199 = vmatpush2.msra.mxu0 0.0
    %200 = vmatprep.subr.mxu0 0.0
    %201 = vmatpush2.msra.mxu0 0.0
    %202 = vmatprep.mubr.f32.mxu0 0.0
    %203 = vmatmul.mubr.f32.gmra.mxu0 %v133
    %v204 = vpop.f32.mrf.mxu0
    %v205 = vadd.f32 %v129, %v204
    %v206 = vpop.f32.mrf.mxu0
    %207 = vdwg.mxu0
    %209 = vrot.lane.b32.xlu0 %v205, 20
    %v210 = vpop.permute.xlu0 %209
    %v212 = vsel %vm131, %v117, %v210
    %vm213 = vcmask 187392
    %v214 = vsel %vm213, %v212, 0.0
    %215 = vst [vmem:[#allocation2] sm:$0xff] %v214
    // Predicated region
    $region22: #{tpu_custom_call.1} parent=1 // pred_check
      _
    $region23: #{tpu_custom_call.1} parent=1 // pred_check_branch
      %217 = sbr.rel (0) target = $region25
    $region24: #{tpu_custom_call.1} parent=1 // pred_region
      %s219 = ssub.s32 128, 128
      %220 = vsyncadd [#allocation3], %s219
      %s222 = sshll.u32 [#allocation2], 4
      %s223 = int_to_ptr.vmem [resolvable:$true] %s222
      %225 = dma.vmem_to_hbm [thread:$0]  %s223, 128, %s5, [#allocation3]
    $region25: #{tpu_custom_call.1} parent=1 // pred_fallthru
      _
    // Predicated region
    $region26: #{tpu_custom_call.1} parent=1 // pred_check
      _
    $region27: #{tpu_custom_call.1} parent=1 // pred_check_branch
      %227 = sbr.rel (0) target = $region29
    $region28: #{tpu_custom_call.1} parent=1 // pred_region
      %228 = dma.done [#allocation3], 128
    $region29: #{tpu_custom_call.1} parent=1 // pred_fallthru
      _
    %229 = vsyncpa [#allocation3], 1

</llo_original>
